<compile_context>
chip_gen: v7x
topology: tpu7x:2x2x1
jax: 0.10.0
libtpu: 0.0.40
codegen_flags: <defaults>
</compile_context>

<pallas_src>
import numpy as np
import jax
import jax.numpy as jnp
from jax.experimental import pallas as pl
from jax.experimental.pallas import tpu as pltpu


def _diffusion_kernel(coef_ref, x0_ref, noise_ref, bias_ref,
                      w1t_ref, w2t_ref, b2_ref, loss_ref):
    """One grid step == one HW tile, all batch elements and channels in-block.

    coef_ref : SMEM (2*B,) interleaved [sab_0, somab_0, sab_1, somab_1, ...]
    x0_ref   : VMEM (B, C, hw_tile)   channels-first, HW on lanes
    noise_ref: VMEM (B, C, hw_tile)
    bias_ref : VMEM (B, hidden, 1)    b1 + time_emb[t_b], broadcast over lanes
    w1t_ref  : VMEM (hidden, C)       w1 transposed
    w2t_ref  : VMEM (C, hidden)       w2 transposed
    b2_ref   : VMEM (C, 1)
    loss_ref : VMEM (B, C, hw_tile)   element-wise squared error
    """
    B = x0_ref.shape[0]

    w1t = w1t_ref[...]
    w2t = w2t_ref[...]
    b2 = b2_ref[...]

    # Static unroll over the (small) batch: no per-step grid overhead, and all
    # elementwise work below runs on full-width (hw_tile >= 128) lane vectors.
    for b in range(B):
        sab = coef_ref[2 * b]
        somab = coef_ref[2 * b + 1]

        # keep the q-sample mix / ReLU / squared error in f32 (safe on v5e even
        # if the HBM transfer dtype is bf16)
        x0 = x0_ref[b].astype(jnp.float32)        # (C, hw)
        noise = noise_ref[b].astype(jnp.float32)  # (C, hw)

        # forward diffusion: x_t = sqrt(abar)*x0 + sqrt(1-abar)*noise
        x_t = sab * x0 + somab * noise            # (C, hw)

        # per-pixel MLP noise predictor, channels-first so outputs are lane-dense.
        # NOTE: K=C=4 / K=hidden=32 are tiny for the MXU, but this kernel is
        # HBM-bound; if the real model is larger, these stay proper MXU matmuls.
        h = jnp.dot(w1t, x_t, preferred_element_type=jnp.float32)      # (hidden, hw)
        h = jnp.maximum(h + bias_ref[b], 0.0)
        pred = jnp.dot(w2t, h, preferred_element_type=jnp.float32) + b2  # (C, hw)

        # MSE with reduction='none' -> element-wise squared error
        d = pred - noise
        loss_ref[b] = (d * d).astype(loss_ref.dtype)


def _pick_hw_tile(HW, B, C, itemsize, vmem_budget_bytes=8 << 20):
    """Largest 128-multiple divisor of HW that keeps the double-buffered working
    set (2 inputs + 1 output, x2 buffers) well under the scoped-VMEM default on
    every TPU generation (incl. v7x's smaller VMEM)."""
    if HW % 128 != 0:
        return HW  # full-extent block is always legal
    max_tile = min(4096, HW)
    if HW >= 1024:
        # keep the parallel HW axis >= 2 tiles (v7x has 2 TensorCores) while
        # tiles stay >= 512 lanes
        max_tile = min(max_tile, HW // 2)
    best = 128
    cand = 128
    while cand <= max_tile:
        if HW % cand == 0 and 6 * B * C * cand * itemsize <= vmem_budget_bytes:
            best = cand
        cand += 128
    return best


def diffusion_trainer_forward(x0_nchw, t, noise_nchw, params, sqrt_ab, sqrt_omab,
                              *, transfer_dtype=jnp.float32):
    """Pallas-backed equivalent of DiffusionTrainer.forward (loss, reduction='none').

    x0_nchw / noise_nchw : (B, C, H, W) float32
    t                    : (B,) int32 timesteps
    returns              : (B, C, H, W) float32 element-wise squared error
    """
    B, C, H, W = x0_nchw.shape
    HW = H * W
    hidden = params["w1"].shape[1]

    # channels-first flatten: pure reshape, no transpose, no extra HBM pass
    x0 = x0_nchw.reshape(B, C, HW).astype(transfer_dtype)
    noise = noise_nchw.reshape(B, C, HW).astype(transfer_dtype)

    # per-batch schedule coefficients, 1-D interleaved (cheap SMEM layout)
    coef = jnp.stack([sqrt_ab[t], sqrt_omab[t]], axis=-1).reshape(-1).astype(jnp.float32)  # (2B,)

    # fold b1 + time embedding into one per-batch bias broadcast over lanes
    bias = (params["b1"].reshape(1, hidden) + params["time_emb"][t]).astype(jnp.float32)   # (B, hidden)
    bias = bias.reshape(B, hidden, 1)

    # tiny weights: transpose once here so in-kernel matmuls are (rows, HW)
    w1t = params["w1"].T.astype(jnp.float32)          # (hidden, C)
    w2t = params["w2"].T.astype(jnp.float32)          # (C, hidden)
    b2 = params["b2"].reshape(C, 1).astype(jnp.float32)

    hw_tile = _pick_hw_tile(HW, B, C, jnp.dtype(transfer_dtype).itemsize)
    grid = (HW // hw_tile,)

    out = pl.pallas_call(
        _diffusion_kernel,
        out_shape=jax.ShapeDtypeStruct((B, C, HW), jnp.float32),
        grid=grid,
        in_specs=[
            pl.BlockSpec(memory_space=pltpu.MemorySpace.SMEM),            # coef (whole, scalar reads)
            pl.BlockSpec((B, C, hw_tile), lambda i: (0, 0, i)),           # x0
            pl.BlockSpec((B, C, hw_tile), lambda i: (0, 0, i)),           # noise
            pl.BlockSpec((B, hidden, 1), lambda i: (0, 0, 0)),            # bias (b1 + temb)
            pl.BlockSpec((hidden, C), lambda i: (0, 0)),                  # w1^T
            pl.BlockSpec((C, hidden), lambda i: (0, 0)),                  # w2^T
            pl.BlockSpec((C, 1), lambda i: (0, 0)),                       # b2
        ],
        out_specs=pl.BlockSpec((B, C, hw_tile), lambda i: (0, 0, i)),
        compiler_params=pltpu.CompilerParams(dimension_semantics=("parallel",)),
    )(coef, x0, noise, bias, w1t, w2t, b2)

    # free reshape back to NCHW (no transpose needed in channels-first layout)
    return out.reshape(B, C, H, W)


def _reference(x0, t, noise, params, sqrt_ab, sqrt_omab):
    """Plain-JAX reference of the same forward pass (for validation)."""
    B, C, H, W = x0.shape
    sab = sqrt_ab[t].reshape(B, 1, 1, 1)
    somab = sqrt_omab[t].reshape(B, 1, 1, 1)
    x_t = sab * x0 + somab * noise
    xt_flat = jnp.transpose(x_t, (0, 2, 3, 1)).reshape(B, H * W, C)
    h = xt_flat @ params["w1"] + params["b1"] + params["time_emb"][t][:, None, :]
    h = jnp.maximum(h, 0.0)
    pred = h @ params["w2"] + params["b2"]
    noise_flat = jnp.transpose(noise, (0, 2, 3, 1)).reshape(B, H * W, C)
    loss = (pred - noise_flat) ** 2
    return loss.reshape(B, H, W, C).transpose(0, 3, 1, 2)


if __name__ == "__main__":
    B, C, H, W = 2, 4, 16, 16
    T = 1000
    hidden = 32
    beta_1, beta_T = 1e-4, 0.02

    key = jax.random.PRNGKey(0)
    k_x, k_t, k_n, k_p = jax.random.split(key, 4)

    # inputs (forward() samples t and noise internally; we sample them
    # deterministically here with JAX RNG and feed them through)
    x0 = jax.random.normal(k_x, (B, C, H, W), dtype=jnp.float32)
    t = jax.random.randint(k_t, (B,), 0, T, dtype=jnp.int32)
    noise = jax.random.normal(k_n, (B, C, H, W), dtype=jnp.float32)

    # diffusion schedule buffers (computed in float64 like torch .double(), then cast)
    betas = np.linspace(beta_1, beta_T, T, dtype=np.float64)
    alphas = 1.0 - betas
    alphas_bar = np.cumprod(alphas)
    sqrt_ab = jnp.asarray(np.sqrt(alphas_bar), dtype=jnp.float32)
    sqrt_omab = jnp.asarray(np.sqrt(1.0 - alphas_bar), dtype=jnp.float32)

    # deterministic synthetic model parameters
    kk = jax.random.split(k_p, 3)
    params = {
        "w1": 0.1 * jax.random.normal(kk[0], (C, hidden), dtype=jnp.float32),
        "b1": jnp.zeros((1, hidden), dtype=jnp.float32),
        "time_emb": 0.1 * jax.random.normal(kk[1], (T, hidden), dtype=jnp.float32),
        "w2": 0.1 * jax.random.normal(kk[2], (hidden, C), dtype=jnp.float32),
        "b2": jnp.zeros((1, C), dtype=jnp.float32),
    }

    # NOTE: on v6e/v7x, pass transfer_dtype=jnp.bfloat16 to halve HBM traffic on
    # this bandwidth-bound kernel (elementwise math stays f32 inside the kernel).
    loss = diffusion_trainer_forward(x0, t, noise, params, sqrt_ab, sqrt_omab,
                                     transfer_dtype=jnp.float32)
    loss = jax.block_until_ready(loss)

    ref = _reference(x0, t, noise, params, sqrt_ab, sqrt_omab)
    assert loss.shape == (B, C, H, W)
    assert np.allclose(np.asarray(loss), np.asarray(ref), rtol=1e-3, atol=1e-3), \
        "Pallas kernel does not match JAX reference"

    print("KERNEL_OK")
</pallas_src>

<mosaic_0001>
module attributes {stable_mosaic.version = 11 : i64} {
  func.func @_diffusion_kernel(%arg0: i32, %arg1: memref<4xf32, #tpu.memory_space<smem>>, %arg2: memref<2x4x256xf32, #tpu.memory_space<vmem>>, %arg3: memref<2x4x256xf32, #tpu.memory_space<vmem>>, %arg4: memref<2x32x1xf32, #tpu.memory_space<vmem>>, %arg5: memref<32x4xf32, #tpu.memory_space<vmem>>, %arg6: memref<4x32xf32, #tpu.memory_space<vmem>>, %arg7: memref<4x1xf32, #tpu.memory_space<vmem>>, %arg8: memref<2x4x256xf32, #tpu.memory_space<vmem>>) attributes {dimension_semantics = [#tpu.dimension_semantics<parallel>], iteration_bounds = array<i64: 1>, scalar_prefetch = 0 : i64, scratch_operands = 0 : i64, tpu.core_type = #tpu.core_type<tc>, window_params = [{transform_indices = @transform_0, window_bounds = array<i64: 4>}, {transform_indices = @transform_1, window_bounds = array<i64: 2, 4, 256>}, {transform_indices = @transform_2, window_bounds = array<i64: 2, 4, 256>}, {pipeline_mode = #tpu.pipeline_mode<synchronous>, transform_indices = @transform_3, window_bounds = array<i64: 2, 32, 1>}, {pipeline_mode = #tpu.pipeline_mode<synchronous>, transform_indices = @transform_4, window_bounds = array<i64: 32, 4>}, {pipeline_mode = #tpu.pipeline_mode<synchronous>, transform_indices = @transform_5, window_bounds = array<i64: 4, 32>}, {pipeline_mode = #tpu.pipeline_mode<synchronous>, transform_indices = @transform_6, window_bounds = array<i64: 4, 1>}, {transform_indices = @transform_7, window_bounds = array<i64: 2, 4, 256>}]} {
    %c0 = arith.constant 0 : index
    %c0_0 = arith.constant 0 : index
    %0 = vector.load %arg5[%c0, %c0_0] : memref<32x4xf32, #tpu.memory_space<vmem>>, vector<32x4xf32>
    %c0_1 = arith.constant 0 : index
    %c0_2 = arith.constant 0 : index
    %1 = vector.load %arg6[%c0_1, %c0_2] : memref<4x32xf32, #tpu.memory_space<vmem>>, vector<4x32xf32>
    %c0_3 = arith.constant 0 : index
    %c0_4 = arith.constant 0 : index
    %2 = vector.load %arg7[%c0_3, %c0_4] : memref<4x1xf32, #tpu.memory_space<vmem>>, vector<4x1xf32>
    %c0_5 = arith.constant 0 : index
    %3 = memref.load %arg1[%c0_5] : memref<4xf32, #tpu.memory_space<smem>>
    %c1 = arith.constant 1 : index
    %4 = memref.load %arg1[%c1] : memref<4xf32, #tpu.memory_space<smem>>
    %c0_6 = arith.constant 0 : index
    %c0_7 = arith.constant 0 : index
    %c0_8 = arith.constant 0 : index
    %5 = vector.load %arg2[%c0_6, %c0_7, %c0_8] : memref<2x4x256xf32, #tpu.memory_space<vmem>>, vector<1x4x256xf32>
    %6 = vector.shape_cast %5 : vector<1x4x256xf32> to vector<4x256xf32>
    %c0_9 = arith.constant 0 : index
    %c0_10 = arith.constant 0 : index
    %c0_11 = arith.constant 0 : index
    %7 = vector.load %arg3[%c0_9, %c0_10, %c0_11] : memref<2x4x256xf32, #tpu.memory_space<vmem>>, vector<1x4x256xf32>
    %8 = vector.shape_cast %7 : vector<1x4x256xf32> to vector<4x256xf32>
    %9 = vector.broadcast %3 : f32 to vector<4x256xf32>
    %10 = arith.mulf %9, %6 : vector<4x256xf32>
    %11 = vector.broadcast %4 : f32 to vector<4x256xf32>
    %12 = arith.mulf %11, %8 : vector<4x256xf32>
    %13 = arith.addf %10, %12 : vector<4x256xf32>
    %cst = arith.constant dense<0.000000e+00> : vector<32x256xf32>
    %14 = tpu.matmul %0, %13, %cst {dimension_numbers = #tpu.dot_dimension_numbers<[1], [0], [0], [1], [0, 0, 1, 1], [], []>} : vector<32x4xf32>, vector<4x256xf32>, vector<32x256xf32> -> vector<32x256xf32>
    %c0_12 = arith.constant 0 : index
    %c0_13 = arith.constant 0 : index
    %c0_14 = arith.constant 0 : index
    %15 = vector.load %arg4[%c0_12, %c0_13, %c0_14] : memref<2x32x1xf32, #tpu.memory_space<vmem>>, vector<1x32x1xf32>
    %16 = vector.shape_cast %15 : vector<1x32x1xf32> to vector<32x1xf32>
    %17 = vector.broadcast %16 : vector<32x1xf32> to vector<32x256xf32>
    %18 = arith.addf %14, %17 : vector<32x256xf32>
    %cst_15 = arith.constant 0.000000e+00 : f32
    %19 = vector.broadcast %cst_15 : f32 to vector<32x256xf32>
    %20 = arith.maximumf %18, %19 : vector<32x256xf32>
    %cst_16 = arith.constant dense<0.000000e+00> : vector<4x256xf32>
    %21 = tpu.matmul %1, %20, %cst_16 {dimension_numbers = #tpu.dot_dimension_numbers<[1], [0], [0], [1], [0, 0, 1, 1], [], []>} : vector<4x32xf32>, vector<32x256xf32>, vector<4x256xf32> -> vector<4x256xf32>
    %22 = vector.broadcast %2 : vector<4x1xf32> to vector<4x256xf32>
    %23 = arith.addf %21, %22 : vector<4x256xf32>
    %24 = arith.subf %23, %8 : vector<4x256xf32>
    %25 = arith.mulf %24, %24 : vector<4x256xf32>
    %c0_17 = arith.constant 0 : index
    %c0_18 = arith.constant 0 : index
    %c0_19 = arith.constant 0 : index
    %26 = vector.load %arg8[%c0_17, %c0_18, %c0_19] : memref<2x4x256xf32, #tpu.memory_space<vmem>>, vector<1x4x256xf32>
    %27 = vector.shape_cast %26 : vector<1x4x256xf32> to vector<4x256xf32>
    %28 = vector.shape_cast %25 : vector<4x256xf32> to vector<1x4x256xf32>
    tpu.vector_store %arg8[%c0_17, %c0_18, %c0_19], %28 {strides = array<i32>} : memref<2x4x256xf32, #tpu.memory_space<vmem>>, vector<1x4x256xf32>,
    %c2 = arith.constant 2 : index
    %29 = memref.load %arg1[%c2] : memref<4xf32, #tpu.memory_space<smem>>
    %c3 = arith.constant 3 : index
    %30 = memref.load %arg1[%c3] : memref<4xf32, #tpu.memory_space<smem>>
    %c1_20 = arith.constant 1 : index
    %c0_21 = arith.constant 0 : index
    %c0_22 = arith.constant 0 : index
    %31 = vector.load %arg2[%c1_20, %c0_21, %c0_22] : memref<2x4x256xf32, #tpu.memory_space<vmem>>, vector<1x4x256xf32>
    %32 = vector.shape_cast %31 : vector<1x4x256xf32> to vector<4x256xf32>
    %c1_23 = arith.constant 1 : index
    %c0_24 = arith.constant 0 : index
    %c0_25 = arith.constant 0 : index
    %33 = vector.load %arg3[%c1_23, %c0_24, %c0_25] : memref<2x4x256xf32, #tpu.memory_space<vmem>>, vector<1x4x256xf32>
    %34 = vector.shape_cast %33 : vector<1x4x256xf32> to vector<4x256xf32>
    %35 = vector.broadcast %29 : f32 to vector<4x256xf32>
    %36 = arith.mulf %35, %32 : vector<4x256xf32>
    %37 = vector.broadcast %30 : f32 to vector<4x256xf32>
    %38 = arith.mulf %37, %34 : vector<4x256xf32>
    %39 = arith.addf %36, %38 : vector<4x256xf32>
    %cst_26 = arith.constant dense<0.000000e+00> : vector<32x256xf32>
    %40 = tpu.matmul %0, %39, %cst_26 {dimension_numbers = #tpu.dot_dimension_numbers<[1], [0], [0], [1], [0, 0, 1, 1], [], []>} : vector<32x4xf32>, vector<4x256xf32>, vector<32x256xf32> -> vector<32x256xf32>
    %c1_27 = arith.constant 1 : index
    %c0_28 = arith.constant 0 : index
    %c0_29 = arith.constant 0 : index
    %41 = vector.load %arg4[%c1_27, %c0_28, %c0_29] : memref<2x32x1xf32, #tpu.memory_space<vmem>>, vector<1x32x1xf32>
    %42 = vector.shape_cast %41 : vector<1x32x1xf32> to vector<32x1xf32>
    %43 = vector.broadcast %42 : vector<32x1xf32> to vector<32x256xf32>
    %44 = arith.addf %40, %43 : vector<32x256xf32>
    %cst_30 = arith.constant 0.000000e+00 : f32
    %45 = vector.broadcast %cst_30 : f32 to vector<32x256xf32>
    %46 = arith.maximumf %44, %45 : vector<32x256xf32>
    %cst_31 = arith.constant dense<0.000000e+00> : vector<4x256xf32>
    %47 = tpu.matmul %1, %46, %cst_31 {dimension_numbers = #tpu.dot_dimension_numbers<[1], [0], [0], [1], [0, 0, 1, 1], [], []>} : vector<4x32xf32>, vector<32x256xf32>, vector<4x256xf32> -> vector<4x256xf32>
    %48 = vector.broadcast %2 : vector<4x1xf32> to vector<4x256xf32>
    %49 = arith.addf %47, %48 : vector<4x256xf32>
    %50 = arith.subf %49, %34 : vector<4x256xf32>
    %51 = arith.mulf %50, %50 : vector<4x256xf32>
    %c1_32 = arith.constant 1 : index
    %c0_33 = arith.constant 0 : index
    %c0_34 = arith.constant 0 : index
    %52 = vector.load %arg8[%c1_32, %c0_33, %c0_34] : memref<2x4x256xf32, #tpu.memory_space<vmem>>, vector<1x4x256xf32>
    %53 = vector.shape_cast %52 : vector<1x4x256xf32> to vector<4x256xf32>
    %54 = vector.shape_cast %51 : vector<4x256xf32> to vector<1x4x256xf32>
    tpu.vector_store %arg8[%c1_32, %c0_33, %c0_34], %54 {strides = array<i32>} : memref<2x4x256xf32, #tpu.memory_space<vmem>>, vector<1x4x256xf32>,
    return
  }
  func.func @transform_0(%arg0: i32) -> i32 {
    %c0_i32 = arith.constant 0 : i32
    %c0_i32_0 = arith.constant 0 : i32
    return %c0_i32 : i32
  }
  func.func @transform_1(%arg0: i32) -> (i32, i32, i32) {
    %c0_i32 = arith.constant 0 : i32
    %c0_i32_0 = arith.constant 0 : i32
    %c0_i32_1 = arith.constant 0 : i32
    return %c0_i32, %c0_i32_0, %arg0 : i32, i32, i32
  }
  func.func @transform_2(%arg0: i32) -> (i32, i32, i32) {
    %c0_i32 = arith.constant 0 : i32
    %c0_i32_0 = arith.constant 0 : i32
    %c0_i32_1 = arith.constant 0 : i32
    return %c0_i32, %c0_i32_0, %arg0 : i32, i32, i32
  }
  func.func @transform_3(%arg0: i32) -> (i32, i32, i32) {
    %c0_i32 = arith.constant 0 : i32
    %c0_i32_0 = arith.constant 0 : i32
    %c0_i32_1 = arith.constant 0 : i32
    %c0_i32_2 = arith.constant 0 : i32
    return %c0_i32, %c0_i32_0, %c0_i32_1 : i32, i32, i32
  }
  func.func @transform_4(%arg0: i32) -> (i32, i32) {
    %c0_i32 = arith.constant 0 : i32
    %c0_i32_0 = arith.constant 0 : i32
    %c0_i32_1 = arith.constant 0 : i32
    return %c0_i32, %c0_i32_0 : i32, i32
  }
  func.func @transform_5(%arg0: i32) -> (i32, i32) {
    %c0_i32 = arith.constant 0 : i32
    %c0_i32_0 = arith.constant 0 : i32
    %c0_i32_1 = arith.constant 0 : i32
    return %c0_i32, %c0_i32_0 : i32, i32
  }
  func.func @transform_6(%arg0: i32) -> (i32, i32) {
    %c0_i32 = arith.constant 0 : i32
    %c0_i32_0 = arith.constant 0 : i32
    %c0_i32_1 = arith.constant 0 : i32
    return %c0_i32, %c0_i32_0 : i32, i32
  }
  func.func @transform_7(%arg0: i32) -> (i32, i32, i32) {
    %c0_i32 = arith.constant 0 : i32
    %c0_i32_0 = arith.constant 0 : i32
    %c0_i32_1 = arith.constant 0 : i32
    return %c0_i32, %c0_i32_0, %arg0 : i32, i32, i32
  }
}

</mosaic_0001>

<llo_original>
// kernel: tpu_custom_call.1
$region0: #{tpu_custom_call.1}
  #allocation0 [shape = 'u32[]', space=smem, size = 0x4, offset = 0x4, fixed_abs, tag = 'smem constant byte address 0x4 - core index']
  #allocation1 [shape = 'u32[144,128]{1,0:T(1,128)}', space=vmem, size = 0x12000, scoped, tag = 'internal scratch']
  %s0 = inlined_call_operand.vmem [shape: f32[4], index: 0, kind: input, shape index: {}]
  %s1 = inlined_call_operand.vmem [shape: f32[2,4,256], index: 1, kind: input, shape index: {}]
  %s2 = inlined_call_operand.vmem [shape: f32[2,4,256], index: 2, kind: input, shape index: {}]
  %s3 = inlined_call_operand.vmem [shape: f32[2,32,1], index: 3, kind: input, shape index: {}]
  %s4 = inlined_call_operand.vmem [shape: f32[32,4], index: 4, kind: input, shape index: {}]
  %s5 = inlined_call_operand.vmem [shape: f32[4,32], index: 5, kind: input, shape index: {}]
  %s6 = inlined_call_operand.vmem [shape: f32[4,1], index: 6, kind: input, shape index: {}]
  %s7 = inlined_call_operand.hbm [shape: f32[2,4,256], index: 7, kind: output, shape index: {}]
  %s8 = sld [smem:[#allocation0]]
  $region42: #{tpu_custom_call.1} parent=0
    _
  %s10 = ssub.s32 1, %s8
  %s11 = scalar_select 0, %s10, %s8
  $region1: #{tpu_custom_call.1} parent=0
    #allocation2 [shape = 'u8[512]{0}', space=smem, size = 0x200, scoped, tag = 'input window, operand 0, single buffered']
    #allocation3 [shape = 's32[1]{0}', space=sflag, size = 0x4, scoped, tag = 'scoped memory for tpu_custom_call.1']
    #allocation4 [shape = 's32[1]{0}', space=sflag, size = 0x4, scoped, tag = 'scoped memory for tpu_custom_call.1']
    #allocation5 [shape = 'u8[8192]{0}', space=vmem, size = 0x2000, scoped, tag = 'output window, operand 0, single buffered']
    %12 = vsyncpa [#allocation4], 0
    %13 = vsyncpa [#allocation3], 0
    // Predicated region
    $region2: #{tpu_custom_call.1} parent=1 // pred_check
      _
    $region3: #{tpu_custom_call.1} parent=1 // pred_check_branch
      %15 = sbr.rel (0) target = $region5
    $region4: #{tpu_custom_call.1} parent=1 // pred_region
      %s17 = ssub.s32 16, 16
      %18 = vsyncadd [#allocation4], %s17
      %s20 = sshll.u32 %s0, 4
      %s21 = int_to_ptr.vmem [resolvable:$true] %s20
      %23 = dma.vmem_to_smem %s21, 16, [#allocation2], [#allocation4]
    $region5: #{tpu_custom_call.1} parent=1 // pred_fallthru
      _
    // Predicated region
    $region6: #{tpu_custom_call.1} parent=1 // pred_check
      _
    $region7: #{tpu_custom_call.1} parent=1 // pred_check_branch
      %25 = sbr.rel (0) target = $region9
    $region8: #{tpu_custom_call.1} parent=1 // pred_region
      _
    $region9: #{tpu_custom_call.1} parent=1 // pred_fallthru
      _
    // Predicated region
    $region10: #{tpu_custom_call.1} parent=1 // pred_check
      _
    $region11: #{tpu_custom_call.1} parent=1 // pred_check_branch
      %27 = sbr.rel (0) target = $region13
    $region12: #{tpu_custom_call.1} parent=1 // pred_region
      _
    $region13: #{tpu_custom_call.1} parent=1 // pred_fallthru
      _
    // Predicated region
    $region14: #{tpu_custom_call.1} parent=1 // pred_check
      _
    $region15: #{tpu_custom_call.1} parent=1 // pred_check_branch
      %29 = sbr.rel (0) target = $region17
    $region16: #{tpu_custom_call.1} parent=1 // pred_region
      _
    $region17: #{tpu_custom_call.1} parent=1 // pred_fallthru
      _
    // Predicated region
    $region18: #{tpu_custom_call.1} parent=1 // pred_check
      _
    $region19: #{tpu_custom_call.1} parent=1 // pred_check_branch
      %31 = sbr.rel (0) target = $region21
    $region20: #{tpu_custom_call.1} parent=1 // pred_region
      _
    $region21: #{tpu_custom_call.1} parent=1 // pred_fallthru
      _
    // Predicated region
    $region22: #{tpu_custom_call.1} parent=1 // pred_check
      _
    $region23: #{tpu_custom_call.1} parent=1 // pred_check_branch
      %33 = sbr.rel (0) target = $region25
    $region24: #{tpu_custom_call.1} parent=1 // pred_region
      _
    $region25: #{tpu_custom_call.1} parent=1 // pred_fallthru
      _
    // Predicated region
    $region26: #{tpu_custom_call.1} parent=1 // pred_check
      _
    $region27: #{tpu_custom_call.1} parent=1 // pred_check_branch
      %35 = sbr.rel (0) target = $region29
    $region28: #{tpu_custom_call.1} parent=1 // pred_region
      _
    $region29: #{tpu_custom_call.1} parent=1 // pred_fallthru
      _
    // Predicated region
    $region30: #{tpu_custom_call.1} parent=1 // pred_check
      _
    $region31: #{tpu_custom_call.1} parent=1 // pred_check_branch
      %37 = sbr.rel (0) target = $region33
    $region32: #{tpu_custom_call.1} parent=1 // pred_region
      %38 = dma.done [#allocation4], 16
    $region33: #{tpu_custom_call.1} parent=1 // pred_fallthru
      _
    %39 = sfence
    %v40 = vld [vmem:[%s4] sm:$0xff]
    %v41 = vld [vmem:[%s4 + $0x8] sm:$0xff]
    %v42 = vld [vmem:[%s4 + $0x10] sm:$0xff]
    %v43 = vld [vmem:[%s4 + $0x18] sm:$0xff]
    %v44 = vld [vmem:[%s5] sm:$0xf]
    %v45 = vld [vmem:[%s6] sm:$0xf]
    %s46 = sld [smem:[#allocation2]]
    %s47 = sld [smem:[#allocation2 + $0x1]]
    %v48 = vld [vmem:[%s1] sm:$0xff]
    %v49 = vld [vmem:[%s2] sm:$0xff]
    %v50 = vstv %s46
    %v51 = vmul.f32 %v50, %v48
    %v52 = vstv %s47
    %v53 = vmul.f32 %v52, %v49
    %v54 = vadd.f32 %v51, %v53
    %v55 = vld [vmem:[%s3] sm:$0xff]
    %v56 = vld [vmem:[%s3 + $0x8] sm:$0xff]
    %v57 = vld [vmem:[%s3 + $0x10] sm:$0xff]
    %v58 = vld [vmem:[%s3 + $0x18] sm:$0xff]
    %60 = vset.pattern.permute.xlu0 0
    %61 = vperm.xlu0 %60, %v55
    %v62 = vpop.permute.xlu0 %61
    %65 = vset.pattern.permute.xlu0 0
    %66 = vperm.xlu0 %65, %v56
    %v67 = vpop.permute.xlu0 %66
    %70 = vset.pattern.permute.xlu0 0
    %71 = vperm.xlu0 %70, %v57
    %v72 = vpop.permute.xlu0 %71
    %75 = vset.pattern.permute.xlu0 0
    %76 = vperm.xlu0 %75, %v58
    %v77 = vpop.permute.xlu0 %76
    %v80 = vcombine.high %v54, %v54
    %vm81 = vcmask 31744
    %v83 = vsel %vm81, %v40, 0
    %v86 = vsel %vm81, %v41, 0
    %v89 = vsel %vm81, %v42, 0
    %v92 = vsel %vm81, %v43, 0
    %vm94 = vcmask 1043456
    %v95 = vsel %vm94, %v54, 0
    %v97 = vsel %vm94, %v80, 0
    %99 = vmatprep.subr.mxu0 %v97
    %100 = vmatpush1.msra.mxu0 %v95
    %101 = vmatprep.subr.mxu0 0.0
    %102 = vmatpush1.msra.mxu0 0.0
    %103 = vmatprep.subr.mxu0 0.0
    %104 = vmatpush1.msra.mxu0 0.0
    %105 = vmatprep.subr.mxu0 0.0
    %106 = vmatpush1.msra.mxu0 0.0
    %107 = vmatprep.subr.mxu0 0.0
    %108 = vmatpush1.msra.mxu0 0.0
    %109 = vmatprep.subr.mxu0 0.0
    %110 = vmatpush1.msra.mxu0 0.0
    %111 = vmatprep.subr.mxu0 0.0
    %112 = vmatpush1.msra.mxu0 0.0
    %113 = vmatprep.subr.mxu0 0.0
    %114 = vmatpush1.msra.mxu0 0.0
    %115 = vmatprep.subr.mxu0 0.0
    %116 = vmatpush1.msra.mxu0 0.0
    %117 = vmatprep.subr.mxu0 0.0
    %118 = vmatpush1.msra.mxu0 0.0
    %119 = vmatprep.subr.mxu0 0.0
    %120 = vmatpush1.msra.mxu0 0.0
    %121 = vmatprep.subr.mxu0 0.0
    %122 = vmatpush1.msra.mxu0 0.0
    %123 = vmatprep.subr.mxu0 0.0
    %124 = vmatpush1.msra.mxu0 0.0
    %125 = vmatprep.subr.mxu0 0.0
    %126 = vmatpush1.msra.mxu0 0.0
    %127 = vmatprep.subr.mxu0 0.0
    %128 = vmatpush1.msra.mxu0 0.0
    %129 = vmatprep.subr.mxu0 0.0
    %130 = vmatpush1.msra.mxu0 0.0
    %131 = vmatprep.subr.mxu0 0.0
    %132 = vmatpush1.msra.mxu0 0.0
    %133 = vmatprep.subr.mxu0 0.0
    %134 = vmatpush1.msra.mxu0 0.0
    %135 = vmatprep.subr.mxu0 0.0
    %136 = vmatpush1.msra.mxu0 0.0
    %137 = vmatprep.subr.mxu0 0.0
    %138 = vmatpush1.msra.mxu0 0.0
    %139 = vmatprep.subr.mxu0 0.0
    %140 = vmatpush1.msra.mxu0 0.0
    %141 = vmatprep.subr.mxu0 0.0
    %142 = vmatpush1.msra.mxu0 0.0
    %143 = vmatprep.subr.mxu0 0.0
    %144 = vmatpush1.msra.mxu0 0.0
    %145 = vmatprep.subr.mxu0 0.0
    %146 = vmatpush1.msra.mxu0 0.0
    %147 = vmatprep.subr.mxu0 0.0
    %148 = vmatpush1.msra.mxu0 0.0
    %149 = vmatprep.subr.mxu0 0.0
    %150 = vmatpush1.msra.mxu0 0.0
    %151 = vmatprep.subr.mxu0 0.0
    %152 = vmatpush1.msra.mxu0 0.0
    %153 = vmatprep.subr.mxu0 0.0
    %154 = vmatpush1.msra.mxu0 0.0
    %155 = vmatprep.subr.mxu0 0.0
    %156 = vmatpush1.msra.mxu0 0.0
    %157 = vmatprep.subr.mxu0 0.0
    %158 = vmatpush1.msra.mxu0 0.0
    %159 = vmatprep.subr.mxu0 0.0
    %160 = vmatpush1.msra.mxu0 0.0
    %161 = vmatprep.subr.mxu0 0.0
    %162 = vmatpush1.msra.mxu0 0.0
    %163 = vmatprep.mubr.f32.mxu0 0.0
    %164 = vmatmul.mubr.f32.gmra.mrb[0].mxu0 %v83
    %v165 = vpop.f32.mrb[0].mxu0
    %v166 = vadd.f32 %v62, %v165
    %v167 = vpop.f32.mrb[0].mxu0
    %v168 = vadd.f32 %v62, %v167
    %169 = vmatprep.mubr.f32.mxu0 0.0
    %170 = vmatmul.mubr.f32.gmra.mrb[0].mxu0 %v86
    %v171 = vpop.f32.mrb[0].mxu0
    %v172 = vadd.f32 %v67, %v171
    %v173 = vpop.f32.mrb[0].mxu0
    %v174 = vadd.f32 %v67, %v173
    %175 = vmatprep.mubr.f32.mxu0 0.0
    %176 = vmatmul.mubr.f32.gmra.mrb[0].mxu0 %v89
    %v177 = vpop.f32.mrb[0].mxu0
    %v178 = vadd.f32 %v72, %v177
    %v179 = vpop.f32.mrb[0].mxu0
    %v180 = vadd.f32 %v72, %v179
    %181 = vmatprep.mubr.f32.mxu0 0.0
    %182 = vmatmul.mubr.f32.gmra.mrb[0].mxu0 %v92
    %v183 = vpop.f32.mrb[0].mxu0
    %v184 = vadd.f32 %v77, %v183
    %v185 = vpop.f32.mrb[0].mxu0
    %v186 = vadd.f32 %v77, %v185
    %187 = vdwg.mxu0
    %v188 = vmax.f32 %v166, 0.0
    %v189 = vmax.f32 %v168, 0.0
    %v190 = vmax.f32 %v172, 0.0
    %v191 = vmax.f32 %v174, 0.0
    %v192 = vmax.f32 %v178, 0.0
    %v193 = vmax.f32 %v180, 0.0
    %v194 = vmax.f32 %v184, 0.0
    %v195 = vmax.f32 %v186, 0.0
    %197 = vset.pattern.permute.xlu0 0
    %198 = vperm.xlu0 %197, %v45
    %v199 = vpop.permute.xlu0 %198
    %vm201 = vcmask 261120
    %v203 = vsel %vm201, %v44, 0
    %205 = vmatprep.subr.mxu0 %v189
    %206 = vmatpush1.msra.mxu0 %v188
    %207 = vmatprep.subr.mxu0 %v191
    %208 = vmatpush1.msra.mxu0 %v190
    %209 = vmatprep.subr.mxu0 %v193
    %210 = vmatpush1.msra.mxu0 %v192
    %211 = vmatprep.subr.mxu0 %v195
    %212 = vmatpush1.msra.mxu0 %v194
    %213 = vmatprep.subr.mxu0 0.0
    %214 = vmatpush1.msra.mxu0 0.0
    %215 = vmatprep.subr.mxu0 0.0
    %216 = vmatpush1.msra.mxu0 0.0
    %217 = vmatprep.subr.mxu0 0.0
    %218 = vmatpush1.msra.mxu0 0.0
    %219 = vmatprep.subr.mxu0 0.0
    %220 = vmatpush1.msra.mxu0 0.0
    %221 = vmatprep.subr.mxu0 0.0
    %222 = vmatpush1.msra.mxu0 0.0
    %223 = vmatprep.subr.mxu0 0.0
    %224 = vmatpush1.msra.mxu0 0.0
    %225 = vmatprep.subr.mxu0 0.0
    %226 = vmatpush1.msra.mxu0 0.0
    %227 = vmatprep.subr.mxu0 0.0
    %228 = vmatpush1.msra.mxu0 0.0
    %229 = vmatprep.subr.mxu0 0.0
    %230 = vmatpush1.msra.mxu0 0.0
    %231 = vmatprep.subr.mxu0 0.0
    %232 = vmatpush1.msra.mxu0 0.0
    %233 = vmatprep.subr.mxu0 0.0
    %234 = vmatpush1.msra.mxu0 0.0
    %235 = vmatprep.subr.mxu0 0.0
    %236 = vmatpush1.msra.mxu0 0.0
    %237 = vmatprep.subr.mxu0 0.0
    %238 = vmatpush1.msra.mxu0 0.0
    %239 = vmatprep.subr.mxu0 0.0
    %240 = vmatpush1.msra.mxu0 0.0
    %241 = vmatprep.subr.mxu0 0.0
    %242 = vmatpush1.msra.mxu0 0.0
    %243 = vmatprep.subr.mxu0 0.0
    %244 = vmatpush1.msra.mxu0 0.0
    %245 = vmatprep.subr.mxu0 0.0
    %246 = vmatpush1.msra.mxu0 0.0
    %247 = vmatprep.subr.mxu0 0.0
    %248 = vmatpush1.msra.mxu0 0.0
    %249 = vmatprep.subr.mxu0 0.0
    %250 = vmatpush1.msra.mxu0 0.0
    %251 = vmatprep.subr.mxu0 0.0
    %252 = vmatpush1.msra.mxu0 0.0
    %253 = vmatprep.subr.mxu0 0.0
    %254 = vmatpush1.msra.mxu0 0.0
    %255 = vmatprep.subr.mxu0 0.0
    %256 = vmatpush1.msra.mxu0 0.0
    %257 = vmatprep.subr.mxu0 0.0
    %258 = vmatpush1.msra.mxu0 0.0
    %259 = vmatprep.subr.mxu0 0.0
    %260 = vmatpush1.msra.mxu0 0.0
    %261 = vmatprep.subr.mxu0 0.0
    %262 = vmatpush1.msra.mxu0 0.0
    %263 = vmatprep.subr.mxu0 0.0
    %264 = vmatpush1.msra.mxu0 0.0
    %265 = vmatprep.subr.mxu0 0.0
    %266 = vmatpush1.msra.mxu0 0.0
    %267 = vmatprep.subr.mxu0 0.0
    %268 = vmatpush1.msra.mxu0 0.0
    %269 = vmatprep.mubr.f32.mxu0 0.0
    %270 = vmatmul.mubr.f32.gmra.mrb[0].mxu0 %v203
    %v271 = vpop.f32.mrb[0].mxu0
    %v272 = vadd.f32 %v199, %v271
    %v273 = vpop.f32.mrb[0].mxu0
    %v274 = vadd.f32 %v199, %v273
    %275 = vdwg.mxu0
    %v277 = vcombine.high %v49, %v49
    %v279 = vsub.f32 %v272, %v49
    %v280 = vsub.f32 %v274, %v277
    %v281 = vmul.f32 %v279, %v279
    %v282 = vmul.f32 %v280, %v280
    %v285 = vcombine.low %v281, %v282
    %287 = vst [vmem:[#allocation5] sm:$0xff] %v285
    %s288 = sld [smem:[#allocation2 + $0x2]]
    %s289 = sld [smem:[#allocation2 + $0x3]]
    %s290 = scalar_lea.vmem %s1, 8
    %v291 = vld [vmem:[%s290] sm:$0xff]
    %s292 = scalar_lea.vmem %s2, 8
    %v293 = vld [vmem:[%s292] sm:$0xff]
    %v294 = vstv %s288
    %v295 = vmul.f32 %v294, %v291
    %v296 = vstv %s289
    %v297 = vmul.f32 %v296, %v293
    %v298 = vadd.f32 %v295, %v297
    %s299 = scalar_lea.vmem %s3, 32
    %v300 = vld [vmem:[%s299] sm:$0xff]
    %v301 = vld [vmem:[%s299 + $0x8] sm:$0xff]
    %v302 = vld [vmem:[%s299 + $0x10] sm:$0xff]
    %v303 = vld [vmem:[%s299 + $0x18] sm:$0xff]
    %305 = vset.pattern.permute.xlu0 0
    %306 = vperm.xlu0 %305, %v300
    %v307 = vpop.permute.xlu0 %306
    %310 = vset.pattern.permute.xlu0 0
    %311 = vperm.xlu0 %310, %v301
    %v312 = vpop.permute.xlu0 %311
    %315 = vset.pattern.permute.xlu0 0
    %316 = vperm.xlu0 %315, %v302
    %v317 = vpop.permute.xlu0 %316
    %320 = vset.pattern.permute.xlu0 0
    %321 = vperm.xlu0 %320, %v303
    %v322 = vpop.permute.xlu0 %321
    %v325 = vcombine.high %v298, %v298
    %v326 = vsel %vm94, %v298, 0
    %v328 = vsel %vm94, %v325, 0
    %330 = vmatprep.subr.mxu0 %v328
    %331 = vmatpush1.msra.mxu0 %v326
    %332 = vmatprep.subr.mxu0 0.0
    %333 = vmatpush1.msra.mxu0 0.0
    %334 = vmatprep.subr.mxu0 0.0
    %335 = vmatpush1.msra.mxu0 0.0
    %336 = vmatprep.subr.mxu0 0.0
    %337 = vmatpush1.msra.mxu0 0.0
    %338 = vmatprep.subr.mxu0 0.0
    %339 = vmatpush1.msra.mxu0 0.0
    %340 = vmatprep.subr.mxu0 0.0
    %341 = vmatpush1.msra.mxu0 0.0
    %342 = vmatprep.subr.mxu0 0.0
    %343 = vmatpush1.msra.mxu0 0.0
    %344 = vmatprep.subr.mxu0 0.0
    %345 = vmatpush1.msra.mxu0 0.0
    %346 = vmatprep.subr.mxu0 0.0
    %347 = vmatpush1.msra.mxu0 0.0
    %348 = vmatprep.subr.mxu0 0.0
    %349 = vmatpush1.msra.mxu0 0.0
    %350 = vmatprep.subr.mxu0 0.0
    %351 = vmatpush1.msra.mxu0 0.0
    %352 = vmatprep.subr.mxu0 0.0
    %353 = vmatpush1.msra.mxu0 0.0
    %354 = vmatprep.subr.mxu0 0.0
    %355 = vmatpush1.msra.mxu0 0.0
    %356 = vmatprep.subr.mxu0 0.0
    %357 = vmatpush1.msra.mxu0 0.0
    %358 = vmatprep.subr.mxu0 0.0
    %359 = vmatpush1.msra.mxu0 0.0
    %360 = vmatprep.subr.mxu0 0.0
    %361 = vmatpush1.msra.mxu0 0.0
    %362 = vmatprep.subr.mxu0 0.0
    %363 = vmatpush1.msra.mxu0 0.0
    %364 = vmatprep.subr.mxu0 0.0
    %365 = vmatpush1.msra.mxu0 0.0
    %366 = vmatprep.subr.mxu0 0.0
    %367 = vmatpush1.msra.mxu0 0.0
    %368 = vmatprep.subr.mxu0 0.0
    %369 = vmatpush1.msra.mxu0 0.0
    %370 = vmatprep.subr.mxu0 0.0
    %371 = vmatpush1.msra.mxu0 0.0
    %372 = vmatprep.subr.mxu0 0.0
    %373 = vmatpush1.msra.mxu0 0.0
    %374 = vmatprep.subr.mxu0 0.0
    %375 = vmatpush1.msra.mxu0 0.0
    %376 = vmatprep.subr.mxu0 0.0
    %377 = vmatpush1.msra.mxu0 0.0
    %378 = vmatprep.subr.mxu0 0.0
    %379 = vmatpush1.msra.mxu0 0.0
    %380 = vmatprep.subr.mxu0 0.0
    %381 = vmatpush1.msra.mxu0 0.0
    %382 = vmatprep.subr.mxu0 0.0
    %383 = vmatpush1.msra.mxu0 0.0
    %384 = vmatprep.subr.mxu0 0.0
    %385 = vmatpush1.msra.mxu0 0.0
    %386 = vmatprep.subr.mxu0 0.0
    %387 = vmatpush1.msra.mxu0 0.0
    %388 = vmatprep.subr.mxu0 0.0
    %389 = vmatpush1.msra.mxu0 0.0
    %390 = vmatprep.subr.mxu0 0.0
    %391 = vmatpush1.msra.mxu0 0.0
    %392 = vmatprep.subr.mxu0 0.0
    %393 = vmatpush1.msra.mxu0 0.0
    %394 = vmatprep.mubr.f32.mxu0 0.0
    %395 = vmatmul.mubr.f32.gmra.mrb[0].mxu0 %v83
    %v396 = vpop.f32.mrb[0].mxu0
    %v397 = vadd.f32 %v307, %v396
    %v398 = vpop.f32.mrb[0].mxu0
    %v399 = vadd.f32 %v307, %v398
    %400 = vmatprep.mubr.f32.mxu0 0.0
    %401 = vmatmul.mubr.f32.gmra.mrb[0].mxu0 %v86
    %v402 = vpop.f32.mrb[0].mxu0
    %v403 = vadd.f32 %v312, %v402
    %v404 = vpop.f32.mrb[0].mxu0
    %v405 = vadd.f32 %v312, %v404
    %406 = vmatprep.mubr.f32.mxu0 0.0
    %407 = vmatmul.mubr.f32.gmra.mrb[0].mxu0 %v89
    %v408 = vpop.f32.mrb[0].mxu0
    %v409 = vadd.f32 %v317, %v408
    %v410 = vpop.f32.mrb[0].mxu0
    %v411 = vadd.f32 %v317, %v410
    %412 = vmatprep.mubr.f32.mxu0 0.0
    %413 = vmatmul.mubr.f32.gmra.mrb[0].mxu0 %v92
    %v414 = vpop.f32.mrb[0].mxu0
    %v415 = vadd.f32 %v322, %v414
    %v416 = vpop.f32.mrb[0].mxu0
    %v417 = vadd.f32 %v322, %v416
    %418 = vdwg.mxu0
    %v419 = vmax.f32 %v397, 0.0
    %v420 = vmax.f32 %v399, 0.0
    %v421 = vmax.f32 %v403, 0.0
    %v422 = vmax.f32 %v405, 0.0
    %v423 = vmax.f32 %v409, 0.0
    %v424 = vmax.f32 %v411, 0.0
    %v425 = vmax.f32 %v415, 0.0
    %v426 = vmax.f32 %v417, 0.0
    %427 = vmatprep.subr.mxu0 %v420
    %428 = vmatpush1.msra.mxu0 %v419
    %429 = vmatprep.subr.mxu0 %v422
    %430 = vmatpush1.msra.mxu0 %v421
    %431 = vmatprep.subr.mxu0 %v424
    %432 = vmatpush1.msra.mxu0 %v423
    %433 = vmatprep.subr.mxu0 %v426
    %434 = vmatpush1.msra.mxu0 %v425
    %435 = vmatprep.subr.mxu0 0.0
    %436 = vmatpush1.msra.mxu0 0.0
    %437 = vmatprep.subr.mxu0 0.0
    %438 = vmatpush1.msra.mxu0 0.0
    %439 = vmatprep.subr.mxu0 0.0
    %440 = vmatpush1.msra.mxu0 0.0
    %441 = vmatprep.subr.mxu0 0.0
    %442 = vmatpush1.msra.mxu0 0.0
    %443 = vmatprep.subr.mxu0 0.0
    %444 = vmatpush1.msra.mxu0 0.0
    %445 = vmatprep.subr.mxu0 0.0
    %446 = vmatpush1.msra.mxu0 0.0
    %447 = vmatprep.subr.mxu0 0.0
    %448 = vmatpush1.msra.mxu0 0.0
    %449 = vmatprep.subr.mxu0 0.0
    %450 = vmatpush1.msra.mxu0 0.0
    %451 = vmatprep.subr.mxu0 0.0
    %452 = vmatpush1.msra.mxu0 0.0
    %453 = vmatprep.subr.mxu0 0.0
    %454 = vmatpush1.msra.mxu0 0.0
    %455 = vmatprep.subr.mxu0 0.0
    %456 = vmatpush1.msra.mxu0 0.0
    %457 = vmatprep.subr.mxu0 0.0
    %458 = vmatpush1.msra.mxu0 0.0
    %459 = vmatprep.subr.mxu0 0.0
    %460 = vmatpush1.msra.mxu0 0.0
    %461 = vmatprep.subr.mxu0 0.0
    %462 = vmatpush1.msra.mxu0 0.0
    %463 = vmatprep.subr.mxu0 0.0
    %464 = vmatpush1.msra.mxu0 0.0
    %465 = vmatprep.subr.mxu0 0.0
    %466 = vmatpush1.msra.mxu0 0.0
    %467 = vmatprep.subr.mxu0 0.0
    %468 = vmatpush1.msra.mxu0 0.0
    %469 = vmatprep.subr.mxu0 0.0
    %470 = vmatpush1.msra.mxu0 0.0
    %471 = vmatprep.subr.mxu0 0.0
    %472 = vmatpush1.msra.mxu0 0.0
    %473 = vmatprep.subr.mxu0 0.0
    %474 = vmatpush1.msra.mxu0 0.0
    %475 = vmatprep.subr.mxu0 0.0
    %476 = vmatpush1.msra.mxu0 0.0
    %477 = vmatprep.subr.mxu0 0.0
    %478 = vmatpush1.msra.mxu0 0.0
    %479 = vmatprep.subr.mxu0 0.0
    %480 = vmatpush1.msra.mxu0 0.0
    %481 = vmatprep.subr.mxu0 0.0
    %482 = vmatpush1.msra.mxu0 0.0
    %483 = vmatprep.subr.mxu0 0.0
    %484 = vmatpush1.msra.mxu0 0.0
    %485 = vmatprep.subr.mxu0 0.0
    %486 = vmatpush1.msra.mxu0 0.0
    %487 = vmatprep.subr.mxu0 0.0
    %488 = vmatpush1.msra.mxu0 0.0
    %489 = vmatprep.subr.mxu0 0.0
    %490 = vmatpush1.msra.mxu0 0.0
    %491 = vmatprep.mubr.f32.mxu0 0.0
    %492 = vmatmul.mubr.f32.gmra.mrb[0].mxu0 %v203
    %v493 = vpop.f32.mrb[0].mxu0
    %v494 = vadd.f32 %v199, %v493
    %v495 = vpop.f32.mrb[0].mxu0
    %v496 = vadd.f32 %v199, %v495
    %497 = vdwg.mxu0
    %v499 = vcombine.high %v293, %v293
    %v501 = vsub.f32 %v494, %v293
    %v502 = vsub.f32 %v496, %v499
    %v503 = vmul.f32 %v501, %v501
    %v504 = vmul.f32 %v502, %v502
    %v507 = vcombine.low %v503, %v504
    %s509 = scalar_lea.vmem [#allocation5], 8
    %510 = vst [vmem:[%s509] sm:$0xff] %v507
    // Predicated region
    $region34: #{tpu_custom_call.1} parent=1 // pred_check
      _
    $region35: #{tpu_custom_call.1} parent=1 // pred_check_branch
      %512 = sbr.rel (0) target = $region37
    $region36: #{tpu_custom_call.1} parent=1 // pred_region
      %s514 = ssub.s32 256, 256
      %515 = vsyncadd [#allocation3], %s514
      %s516 = sshll.u32 [#allocation5], 4
      %s517 = int_to_ptr.vmem [resolvable:$true] %s516
      %522 = dma.vmem_to_hbm [thread:$0]  %s517, 256, %s7, [#allocation3], 128, 128, 8
    $region37: #{tpu_custom_call.1} parent=1 // pred_fallthru
      _
    // Predicated region
    $region38: #{tpu_custom_call.1} parent=1 // pred_check
      _
    $region39: #{tpu_custom_call.1} parent=1 // pred_check_branch
      %524 = sbr.rel (0) target = $region41
    $region40: #{tpu_custom_call.1} parent=1 // pred_region
      %525 = dma.done [#allocation3], 256
    $region41: #{tpu_custom_call.1} parent=1 // pred_fallthru
      _
    %526 = vsyncpa [#allocation3], 1
    %527 = vsyncpa [#allocation4], 1

</llo_original>
